<compile_context>
chip_gen: v6e
topology: v6e:2x2x1
jax: 0.10.0
libtpu: 0.0.40
codegen_flags: <defaults>
</compile_context>

<pallas_src>
import math

import jax
import jax.numpy as jnp
from jax import lax
from jax.experimental import pallas as pl
from jax.experimental.pallas import tpu as pltpu


def _round_up(x: int, m: int) -> int:
    return ((x + m - 1) // m) * m


# ---------------------------------------------------------------------------
# Small path: single invocation, whole problem resident in VMEM, no grid.
# ---------------------------------------------------------------------------
def _linear_kernel_small(x_ref, w_ref, b_ref, o_ref):
    # x: (M, K), w: (N, K) -> contract K of both; no materialized W^T anywhere.
    acc = lax.dot_general(
        x_ref[...], w_ref[...],
        dimension_numbers=(((1,), (1,)), ((), ())),
        preferred_element_type=jnp.float32,
    )
    o_ref[...] = (acc + b_ref[...]).astype(o_ref.dtype)


# ---------------------------------------------------------------------------
# Tiled path: (M//tm, N//tn, K//tk) grid, K innermost, f32 accumulator.
# ---------------------------------------------------------------------------
def _linear_kernel_tiled(x_ref, w_ref, b_ref, o_ref, acc_ref):
    k = pl.program_id(2)

    @pl.when(k == 0)
    def _():
        acc_ref[...] = jnp.zeros_like(acc_ref)

    acc_ref[...] += lax.dot_general(
        x_ref[...], w_ref[...],
        dimension_numbers=(((1,), (1,)), ((), ())),
        preferred_element_type=jnp.float32,
    )

    @pl.when(k == pl.num_programs(2) - 1)
    def _():
        o_ref[...] = (acc_ref[...] + b_ref[...]).astype(o_ref.dtype)


_SMALL_PATH_BYTES = 4 * 1024 * 1024  # threshold for the grid-less path


def linear_net_forward(x, weight, bias, *, tm=256, tn=256, tk=512):
    """y = x @ weight.T + bias, matching torch.nn.Linear.forward.

    x:      (batch, input_dim)
    weight: (output_dim, input_dim)   -- PyTorch layout, NOT transposed here
    bias:   (output_dim,)
    """
    batch, input_dim = x.shape
    output_dim = weight.shape[0]
    itemsize = jnp.dtype(x.dtype).itemsize

    cost = pl.CostEstimate(
        flops=2 * batch * input_dim * output_dim,
        transcendentals=0,
        bytes_accessed=(x.size + weight.size + bias.size
                        + batch * output_dim) * itemsize,
    )

    # Lane-dense output: round N up to a full 128-lane vreg. No-op when the
    # model's output_dim is already 128-aligned.
    n_pad = _round_up(output_dim, 128)
    if n_pad != output_dim:
        weight = jnp.pad(weight, ((0, n_pad - output_dim), (0, 0)))
        bias = jnp.pad(bias, (0, n_pad - output_dim))
    b2 = bias.reshape(1, n_pad)

    working_set = (batch * input_dim + n_pad * input_dim
                   + n_pad + batch * n_pad) * itemsize

    if working_set <= _SMALL_PATH_BYTES:
        # Grid-less call: no pipeline bookkeeping, no double buffering.
        y = pl.pallas_call(
            _linear_kernel_small,
            out_shape=jax.ShapeDtypeStruct((batch, n_pad), x.dtype),
            in_specs=[
                pl.BlockSpec(memory_space=pltpu.MemorySpace.VMEM),
                pl.BlockSpec(memory_space=pltpu.MemorySpace.VMEM),
                pl.BlockSpec(memory_space=pltpu.MemorySpace.VMEM),
            ],
            out_specs=pl.BlockSpec(memory_space=pltpu.MemorySpace.VMEM),
            cost_estimate=cost,
        )(x, weight, b2)
        return y[:, :output_dim] if n_pad != output_dim else y

    # ---- tiled path (production sizes) ----
    tm = min(tm, _round_up(batch, 8))
    tn = min(tn, n_pad)
    tk = min(tk, _round_up(input_dim, 128))

    m_pad = _round_up(batch, tm)
    k_pad = _round_up(input_dim, tk)
    n_pad2 = _round_up(n_pad, tn)

    if (m_pad, k_pad) != (batch, input_dim):
        x = jnp.pad(x, ((0, m_pad - batch), (0, k_pad - input_dim)))
    if (n_pad2, k_pad) != (n_pad, input_dim):
        weight = jnp.pad(weight, ((0, n_pad2 - n_pad), (0, k_pad - input_dim)))
    if n_pad2 != n_pad:
        b2 = jnp.pad(b2, ((0, 0), (0, n_pad2 - n_pad)))

    grid = (m_pad // tm, n_pad2 // tn, k_pad // tk)

    y = pl.pallas_call(
        _linear_kernel_tiled,
        out_shape=jax.ShapeDtypeStruct((m_pad, n_pad2), x.dtype),
        grid_spec=pltpu.PrefetchScalarGridSpec(
            num_scalar_prefetch=0,
            grid=grid,
            in_specs=[
                pl.BlockSpec((tm, tk), lambda i, j, k: (i, k)),   # x tile
                pl.BlockSpec((tn, tk), lambda i, j, k: (j, k)),   # W tile (N,K)
                pl.BlockSpec((1, tn), lambda i, j, k: (0, j)),    # bias tile
            ],
            out_specs=pl.BlockSpec((tm, tn), lambda i, j, k: (i, j)),
            scratch_shapes=[pltpu.VMEM((tm, tn), jnp.float32)],
        ),
        compiler_params=pltpu.CompilerParams(
            dimension_semantics=("parallel", "parallel", "arbitrary"),
            vmem_limit_bytes=32 * 1024 * 1024,
        ),
        cost_estimate=cost,
    )(x, weight, b2)
    return y[:batch, :output_dim]


if __name__ == "__main__":
    # Small shapes consistent with the module: LinearNet(input_dim=32, output_dim=16)
    batch, input_dim, output_dim = 8, 32, 16

    key = jax.random.PRNGKey(0)
    kx, kw, kb = jax.random.split(key, 3)

    # Deterministic param init mirroring nn.Linear's default
    # uniform(-1/sqrt(in_features), 1/sqrt(in_features)).
    bound = 1.0 / math.sqrt(input_dim)
    weight = jax.random.uniform(
        kw, (output_dim, input_dim), jnp.float32, minval=-bound, maxval=bound
    )
    bias = jax.random.uniform(
        kb, (output_dim,), jnp.float32, minval=-bound, maxval=bound
    )
    x = jax.random.normal(kx, (batch, input_dim), jnp.float32)

    y = linear_net_forward(x, weight, bias)
    y = jax.block_until_ready(y)

    # Correctness check against plain JAX reference of nn.Linear semantics.
    y_ref = x @ weight.T + bias
    assert y.shape == (batch, output_dim)
    assert jnp.allclose(y, y_ref, atol=1e-5, rtol=1e-5)

    print("KERNEL_OK")
</pallas_src>

<mosaic_0001>
module attributes {stable_mosaic.version = 11 : i64} {
  func.func @_linear_kernel_small(%arg0: memref<8x32xf32, #tpu.memory_space<vmem>>, %arg1: memref<128x32xf32, #tpu.memory_space<vmem>>, %arg2: memref<1x128xf32, #tpu.memory_space<vmem>>, %arg3: memref<8x128xf32, #tpu.memory_space<vmem>>) attributes {dimension_semantics = [], scalar_prefetch = 0 : i64, scratch_operands = 0 : i64, tpu.core_type = #tpu.core_type<tc>} {
    %c0 = arith.constant 0 : index
    %c0_0 = arith.constant 0 : index
    %0 = vector.load %arg0[%c0, %c0_0] : memref<8x32xf32, #tpu.memory_space<vmem>>, vector<8x32xf32>
    %c0_1 = arith.constant 0 : index
    %c0_2 = arith.constant 0 : index
    %1 = vector.load %arg1[%c0_1, %c0_2] : memref<128x32xf32, #tpu.memory_space<vmem>>, vector<128x32xf32>
    %cst = arith.constant dense<0.000000e+00> : vector<8x128xf32>
    %2 = tpu.matmul %0, %1, %cst {dimension_numbers = #tpu.dot_dimension_numbers<[1], [1], [0], [0], [0, 0, 1, 0], [], []>} : vector<8x32xf32>, vector<128x32xf32>, vector<8x128xf32> -> vector<8x128xf32>
    %c0_3 = arith.constant 0 : index
    %c0_4 = arith.constant 0 : index
    %3 = vector.load %arg2[%c0_3, %c0_4] : memref<1x128xf32, #tpu.memory_space<vmem>>, vector<1x128xf32>
    %4 = vector.broadcast %3 : vector<1x128xf32> to vector<8x128xf32>
    %5 = arith.addf %2, %4 : vector<8x128xf32>
    %c0_5 = arith.constant 0 : index
    %c0_6 = arith.constant 0 : index
    %6 = vector.load %arg3[%c0_5, %c0_6] : memref<8x128xf32, #tpu.memory_space<vmem>>, vector<8x128xf32>
    tpu.vector_store %arg3[%c0_5, %c0_6], %5 {strides = array<i32>} : memref<8x128xf32, #tpu.memory_space<vmem>>, vector<8x128xf32>,
    return
  }
}

</mosaic_0001>

<llo_original>
// kernel: tpu_custom_call.1
$region0: #{tpu_custom_call.1}
  #allocation0 [shape = 'u32[]', space=smem, size = 0x4, offset = 0x4, fixed_abs, tag = 'smem constant byte address 0x4 - core index']
  #allocation1 [shape = 'u32[144,128]{1,0:T(1,128)}', space=vmem, size = 0x12000, scoped, tag = 'internal scratch']
  %s0 = inlined_call_operand.vmem [shape: f32[8,32], index: 0, kind: input, shape index: {}]
  %s1 = inlined_call_operand.vmem [shape: f32[128,32], index: 1, kind: input, shape index: {}]
  %s2 = inlined_call_operand.vmem [shape: f32[1,128], index: 2, kind: input, shape index: {}]
  %s3 = inlined_call_operand.hbm [shape: f32[8,128], index: 3, kind: output, shape index: {}]
  %s4 = sld [smem:[#allocation0]]
  $region22: #{tpu_custom_call.1} parent=0
    _
  %s6 = ssub.s32 1, %s4
  %s7 = scalar_select 0, %s6, %s4
  $region1: #{tpu_custom_call.1} parent=0
    #allocation2 [shape = 'u8[4096]{0}', space=vmem, size = 0x1000, scoped, tag = 'output window, operand 0, single buffered']
    #allocation3 [shape = 's32[1]{0}', space=sflag, size = 0x4, scoped, tag = 'scoped memory for tpu_custom_call.1']
    %8 = vsyncpa [#allocation3], 0
    // Predicated region
    $region2: #{tpu_custom_call.1} parent=1 // pred_check
      _
    $region3: #{tpu_custom_call.1} parent=1 // pred_check_branch
      %10 = sbr.rel (0) target = $region5
    $region4: #{tpu_custom_call.1} parent=1 // pred_region
      _
    $region5: #{tpu_custom_call.1} parent=1 // pred_fallthru
      _
    // Predicated region
    $region6: #{tpu_custom_call.1} parent=1 // pred_check
      _
    $region7: #{tpu_custom_call.1} parent=1 // pred_check_branch
      %12 = sbr.rel (0) target = $region9
    $region8: #{tpu_custom_call.1} parent=1 // pred_region
      _
    $region9: #{tpu_custom_call.1} parent=1 // pred_fallthru
      _
    // Predicated region
    $region10: #{tpu_custom_call.1} parent=1 // pred_check
      _
    $region11: #{tpu_custom_call.1} parent=1 // pred_check_branch
      %14 = sbr.rel (0) target = $region13
    $region12: #{tpu_custom_call.1} parent=1 // pred_region
      _
    $region13: #{tpu_custom_call.1} parent=1 // pred_fallthru
      _
    %v15 = vld [vmem:[%s0] sm:$0xff]
    %v16 = vld [vmem:[%s1] sm:$0xff]
    %v17 = vld [vmem:[%s1 + $0x8] sm:$0xff]
    %v18 = vld [vmem:[%s1 + $0x10] sm:$0xff]
    %v19 = vld [vmem:[%s1 + $0x18] sm:$0xff]
    %v20 = vld [vmem:[%s1 + $0x20] sm:$0xff]
    %v21 = vld [vmem:[%s1 + $0x28] sm:$0xff]
    %v22 = vld [vmem:[%s1 + $0x30] sm:$0xff]
    %v23 = vld [vmem:[%s1 + $0x38] sm:$0xff]
    %v24 = vld [vmem:[%s1 + $0x40] sm:$0xff]
    %v25 = vld [vmem:[%s1 + $0x48] sm:$0xff]
    %v26 = vld [vmem:[%s1 + $0x50] sm:$0xff]
    %v27 = vld [vmem:[%s1 + $0x58] sm:$0xff]
    %v28 = vld [vmem:[%s1 + $0x60] sm:$0xff]
    %v29 = vld [vmem:[%s1 + $0x68] sm:$0xff]
    %v30 = vld [vmem:[%s1 + $0x70] sm:$0xff]
    %v31 = vld [vmem:[%s1 + $0x78] sm:$0xff]
    %v32 = vld [vmem:[%s2] sm:$0x1]
    %v34 = vlaneseq
    %v35 = vshrl.u32 %v34, 7
    %v36 = vsub.s32 0, %v35
    %v37 = vrot.slane %v32, %v36
    %vm39 = vcmask 261120
    %v41 = vsel %vm39, %v15, 0
    %v44 = vsel %vm39, %v16, 0
    %v47 = vsel %vm39, %v17, 0
    %v50 = vsel %vm39, %v18, 0
    %v53 = vsel %vm39, %v19, 0
    %v56 = vsel %vm39, %v20, 0
    %v59 = vsel %vm39, %v21, 0
    %v62 = vsel %vm39, %v22, 0
    %v65 = vsel %vm39, %v23, 0
    %v68 = vsel %vm39, %v24, 0
    %v71 = vsel %vm39, %v25, 0
    %v74 = vsel %vm39, %v26, 0
    %v77 = vsel %vm39, %v27, 0
    %v80 = vsel %vm39, %v28, 0
    %v83 = vsel %vm39, %v29, 0
    %v86 = vsel %vm39, %v30, 0
    %v89 = vsel %vm39, %v31, 0
    %91 = vmatprep.subr.mxu0 0.0
    %92 = vmatpush1.xpose.msra.mxu0 %v89
    %93 = vmatprep.subr.mxu0 0.0
    %94 = vmatpush1.xpose.msra.mxu0 %v86
    %95 = vmatprep.subr.mxu0 0.0
    %96 = vmatpush1.xpose.msra.mxu0 %v83
    %97 = vmatprep.subr.mxu0 0.0
    %98 = vmatpush1.xpose.msra.mxu0 %v80
    %99 = vmatprep.subr.mxu0 0.0
    %100 = vmatpush1.xpose.msra.mxu0 %v77
    %101 = vmatprep.subr.mxu0 0.0
    %102 = vmatpush1.xpose.msra.mxu0 %v74
    %103 = vmatprep.subr.mxu0 0.0
    %104 = vmatpush1.xpose.msra.mxu0 %v71
    %105 = vmatprep.subr.mxu0 0.0
    %106 = vmatpush1.xpose.msra.mxu0 %v68
    %107 = vmatprep.subr.mxu0 0.0
    %108 = vmatpush1.xpose.msra.mxu0 %v65
    %109 = vmatprep.subr.mxu0 0.0
    %110 = vmatpush1.xpose.msra.mxu0 %v62
    %111 = vmatprep.subr.mxu0 0.0
    %112 = vmatpush1.xpose.msra.mxu0 %v59
    %113 = vmatprep.subr.mxu0 0.0
    %114 = vmatpush1.xpose.msra.mxu0 %v56
    %115 = vmatprep.subr.mxu0 0.0
    %116 = vmatpush1.xpose.msra.mxu0 %v53
    %117 = vmatprep.subr.mxu0 0.0
    %118 = vmatpush1.xpose.msra.mxu0 %v50
    %119 = vmatprep.subr.mxu0 0.0
    %120 = vmatpush1.xpose.msra.mxu0 %v47
    %121 = vmatprep.subr.mxu0 0.0
    %122 = vmatpush1.xpose.msra.mxu0 %v44
    %123 = vmatprep.subr.mxu0 0.0
    %124 = vmatpush2.xpose.msra.mxu0 0.0
    %125 = vmatprep.subr.mxu0 0.0
    %126 = vmatpush2.xpose.msra.mxu0 0.0
    %127 = vmatprep.subr.mxu0 0.0
    %128 = vmatpush2.xpose.msra.mxu0 0.0
    %129 = vmatprep.subr.mxu0 0.0
    %130 = vmatpush2.xpose.msra.mxu0 0.0
    %131 = vmatprep.subr.mxu0 0.0
    %132 = vmatpush2.xpose.msra.mxu0 0.0
    %133 = vmatprep.subr.mxu0 0.0
    %134 = vmatpush2.xpose.msra.mxu0 0.0
    %135 = vmatprep.subr.mxu0 0.0
    %136 = vmatpush2.xpose.msra.mxu0 0.0
    %137 = vmatprep.subr.mxu0 0.0
    %138 = vmatpush2.xpose.msra.mxu0 0.0
    %139 = vmatprep.subr.mxu0 0.0
    %140 = vmatpush2.xpose.msra.mxu0 0.0
    %141 = vmatprep.subr.mxu0 0.0
    %142 = vmatpush2.xpose.msra.mxu0 0.0
    %143 = vmatprep.subr.mxu0 0.0
    %144 = vmatpush2.xpose.msra.mxu0 0.0
    %145 = vmatprep.subr.mxu0 0.0
    %146 = vmatpush2.xpose.msra.mxu0 0.0
    %147 = vmatprep.subr.mxu0 0.0
    %148 = vmatpush2.xpose.msra.mxu0 0.0
    %149 = vmatprep.subr.mxu0 0.0
    %150 = vmatpush2.xpose.msra.mxu0 0.0
    %151 = vmatprep.subr.mxu0 0.0
    %152 = vmatpush2.xpose.msra.mxu0 0.0
    %153 = vmatprep.subr.mxu0 0.0
    %154 = vmatpush2.xpose.msra.mxu0 0.0
    %155 = vmatprep.mubr.f32.mxu0 0.0
    %156 = vmatmul.mubr.f32.gmra.mxu0 %v41
    %v157 = vpop.f32.mrf.mxu0
    %v158 = vadd.f32 %v37, %v157
    %v159 = vpop.f32.mrf.mxu0
    %160 = vdwg.mxu0
    %161 = vst [vmem:[#allocation2] sm:$0xff] %v158
    // Predicated region
    $region14: #{tpu_custom_call.1} parent=1 // pred_check
      _
    $region15: #{tpu_custom_call.1} parent=1 // pred_check_branch
      %163 = sbr.rel (0) target = $region17
    $region16: #{tpu_custom_call.1} parent=1 // pred_region
      %s165 = ssub.s32 128, 128
      %166 = vsyncadd [#allocation3], %s165
      %s168 = sshll.u32 [#allocation2], 4
      %s169 = int_to_ptr.vmem [resolvable:$true] %s168
      %171 = dma.vmem_to_hbm [thread:$0]  %s169, 128, %s3, [#allocation3]
    $region17: #{tpu_custom_call.1} parent=1 // pred_fallthru
      _
    // Predicated region
    $region18: #{tpu_custom_call.1} parent=1 // pred_check
      _
    $region19: #{tpu_custom_call.1} parent=1 // pred_check_branch
      %173 = sbr.rel (0) target = $region21
    $region20: #{tpu_custom_call.1} parent=1 // pred_region
      %174 = dma.done [#allocation3], 128
    $region21: #{tpu_custom_call.1} parent=1 // pred_fallthru
      _
    %175 = vsyncpa [#allocation3], 1

</llo_original>
